<compile_context>
chip_gen: v7x
topology: tpu7x:2x2x1
jax: 0.10.0
libtpu: 0.0.40
codegen_flags: <defaults>
</compile_context>

<pallas_src>
import jax
import jax.numpy as jnp
from jax.experimental import pallas as pl
from jax.experimental.pallas import tpu as pltpu


def _round_up(x: int, m: int) -> int:
    return ((x + m - 1) // m) * m


def _sublane_align(dtype) -> int:
    # 8 sublanes for 32-bit, 16 for 16-bit, 32 for 8-bit dtypes.
    return max(8, 32 // jnp.dtype(dtype).itemsize)


def _vmem_budget_bytes() -> int:
    try:
        cap = int(pltpu.get_tpu_info().vmem_capacity_bytes)
        if cap > 0:
            return cap
    except Exception:
        pass
    return 64 * 1024 * 1024  # conservative fallback: v7x per-TensorCore VMEM


def _linear_kernel_inplace(x_ref, w_ref, b_ref, o_ref):
    # x_ref: [tm, tk]  w_ref: [tk, tn] ([K, N] layout)  b_ref: [1, tn]  o_ref: [tm, tn] (f32)
    k = pl.program_id(2)

    @pl.when(k == 0)
    def _init():
        o_ref[...] = jnp.broadcast_to(b_ref[...], o_ref.shape).astype(o_ref.dtype)

    o_ref[...] += jnp.dot(x_ref[...], w_ref[...], preferred_element_type=jnp.float32)


def _linear_kernel_scratch(x_ref, w_ref, b_ref, o_ref, acc_ref):
    # f32 scratch accumulator variant, used when the output dtype is not f32.
    k = pl.program_id(2)

    @pl.when(k == 0)
    def _init():
        acc_ref[...] = jnp.zeros_like(acc_ref)

    acc_ref[...] += jnp.dot(x_ref[...], w_ref[...], preferred_element_type=jnp.float32)

    @pl.when(k == pl.num_programs(2) - 1)
    def _finalize():
        o_ref[...] = (acc_ref[...] + b_ref[...].astype(jnp.float32)).astype(o_ref.dtype)


def vain_transformer_forward(x, weight, bias, *, compute_dtype=None,
                             tm_max=None, tn_max=None, tk_max=None):
    """Pallas equivalent of vAInTransformer.forward (== nn.Linear(input_dim, hidden_dim)).

    x:      [..., input_dim]
    weight: [hidden_dim, input_dim]   (PyTorch nn.Linear layout)
    bias:   [hidden_dim]
    returns [..., hidden_dim] with the dtype of x.
    """
    orig_shape = x.shape
    K = orig_shape[-1]
    N = weight.shape[0]
    assert weight.shape == (N, K), f"weight shape {weight.shape} != ({N}, {K})"

    M = 1
    for d in orig_shape[:-1]:
        M *= int(d)

    out_dtype = x.dtype
    op_dtype = jnp.dtype(compute_dtype) if compute_dtype is not None else jnp.dtype(x.dtype)

    x2d = x.reshape(M, K)
    w_kn = weight.T  # one-time [K, N] layout; amortized over all M-tiles, keeps MXU pipe clean
    if x2d.dtype != op_dtype:
        x2d = x2d.astype(op_dtype)
    if w_kn.dtype != op_dtype:
        w_kn = w_kn.astype(op_dtype)
    b2d = bias.reshape(1, N)

    # ---- VMEM-aware tile selection -------------------------------------------------
    budget = _vmem_budget_bytes()
    if budget >= 96 * 1024 * 1024:       # v5e / v6e: 128 MiB physical VMEM
        tm_cap, tn_cap, tk_cap = 1024, 1024, 2048
    else:                                # v7x (64 MiB per TensorCore) or unknown
        tm_cap, tn_cap, tk_cap = 512, 1024, 1024
    if tm_max is not None:
        tm_cap = tm_max
    if tn_max is not None:
        tn_cap = tn_max
    if tk_max is not None:
        tk_cap = tk_max

    sub = _sublane_align(op_dtype)

    def pick(dim, cap, align):
        if dim <= cap:
            return dim                    # full-dim block is always layout-legal
        return max(align, (cap // align) * align)

    tm = pick(M, tm_cap, sub)
    tn = pick(N, tn_cap, 128)
    tk = pick(K, tk_cap, 128)

    # Only the reduction (K) axis needs zero-padding for correctness; M/N tails become
    # partial blocks whose out-of-range rows/cols are never stored back.
    Kp = K if K % tk == 0 else _round_up(K, tk)
    if Kp != K:
        x2d = jnp.pad(x2d, ((0, 0), (0, Kp - K)))
        w_kn = jnp.pad(w_kn, ((0, Kp - K), (0, 0)))

    n_i, n_j, n_k = pl.cdiv(M, tm), pl.cdiv(N, tn), Kp // tk
    grid = (n_i, n_j, n_k)               # K-reduction axis last

    use_inplace = jnp.dtype(out_dtype) == jnp.dtype(jnp.float32)

    op_bytes = jnp.dtype(op_dtype).itemsize
    out_bytes = jnp.dtype(out_dtype).itemsize
    b_bytes = jnp.dtype(b2d.dtype).itemsize
    tile_bytes = (2 * tm * tk * op_bytes          # x, double-buffered
                  + 2 * tk * tn * op_bytes        # w, double-buffered
                  + 2 * tn * b_bytes              # bias
                  + 2 * tm * tn * out_bytes       # out
                  + (0 if use_inplace else tm * tn * 4))
    vmem_limit = int(min(0.9 * budget, max(32 * 1024 * 1024, 1.5 * tile_bytes)))

    cost = pl.CostEstimate(
        flops=2 * M * N * Kp,
        transcendentals=0,
        # Actual streamed traffic: x is read once per N-tile, w once per M-tile.
        bytes_accessed=int(op_bytes * M * Kp * n_j
                           + op_bytes * Kp * N * n_i
                           + out_bytes * M * N
                           + b_bytes * N * n_i * n_j),
    )

    in_specs = [
        pl.BlockSpec((tm, tk), lambda i, j, k: (i, k)),   # x tile
        pl.BlockSpec((tk, tn), lambda i, j, k: (k, j)),   # weight tile ([K, N])
        pl.BlockSpec((1, tn), lambda i, j, k: (0, j)),    # bias tile
    ]
    out_spec = pl.BlockSpec((tm, tn), lambda i, j, k: (i, j))

    kernel = _linear_kernel_inplace if use_inplace else _linear_kernel_scratch
    scratch = [] if use_inplace else [pltpu.VMEM((tm, tn), jnp.float32)]

    out2d = pl.pallas_call(
        kernel,
        out_shape=jax.ShapeDtypeStruct((M, N), out_dtype),
        grid_spec=pltpu.PrefetchScalarGridSpec(
            num_scalar_prefetch=0,
            grid=grid,
            in_specs=in_specs,
            out_specs=out_spec,
            scratch_shapes=scratch,
        ),
        compiler_params=pltpu.CompilerParams(
            # TODO(synk): on v7x, if profiling shows the grid runs on one TensorCore,
            # switch the M axis to pltpu.CORE_PARALLEL to shard across both cores.
            dimension_semantics=("parallel", "parallel", "arbitrary"),
            vmem_limit_bytes=vmem_limit,
        ),
        cost_estimate=cost,
    )(x2d, w_kn, b2d)

    return out2d.reshape(*orig_shape[:-1], N)


if __name__ == "__main__":
    # Small shapes consistent with the module: Linear(input_dim -> hidden_dim).
    batch, seq = 2, 8
    input_dim, hidden_dim = 16, 32

    key = jax.random.PRNGKey(0)
    kx, kw, kb = jax.random.split(key, 3)

    x = jax.random.normal(kx, (batch, seq, input_dim), dtype=jnp.float32)
    # Deterministic synthetic parameters (shapes from nn.Linear(input_dim, hidden_dim)).
    weight = jax.random.normal(kw, (hidden_dim, input_dim), dtype=jnp.float32) * 0.1
    bias = jax.random.normal(kb, (hidden_dim,), dtype=jnp.float32) * 0.1

    out = jax.block_until_ready(vain_transformer_forward(x, weight, bias))

    # Reference check in plain JAX (same math as torch nn.Linear).
    ref = x @ weight.T + bias
    assert out.shape == (batch, seq, hidden_dim)
    assert out.dtype == x.dtype
    assert jnp.allclose(out, ref, atol=1e-5, rtol=1e-5)

    print("KERNEL_OK")
</pallas_src>

<mosaic_0001>
module attributes {stable_mosaic.version = 11 : i64} {
  func.func @_linear_kernel_inplace(%arg0: i32, %arg1: i32, %arg2: i32, %arg3: memref<16x16xf32, #tpu.memory_space<vmem>>, %arg4: memref<16x32xf32, #tpu.memory_space<vmem>>, %arg5: memref<1x32xf32, #tpu.memory_space<vmem>>, %arg6: memref<16x32xf32, #tpu.memory_space<vmem>>) attributes {dimension_semantics = [#tpu.dimension_semantics<parallel>, #tpu.dimension_semantics<parallel>, #tpu.dimension_semantics<arbitrary>], iteration_bounds = array<i64: 1, 1, 1>, scalar_prefetch = 0 : i64, scratch_operands = 0 : i64, tpu.core_type = #tpu.core_type<tc>, window_params = [{transform_indices = @transform_0, window_bounds = array<i64: 16, 16>}, {transform_indices = @transform_1, window_bounds = array<i64: 16, 32>}, {transform_indices = @transform_2, window_bounds = array<i64: 1, 32>}, {transform_indices = @transform_3, window_bounds = array<i64: 16, 32>}]} {
    %c0_i32 = arith.constant 0 : i32
    %0 = arith.cmpi eq, %arg2, %c0_i32 : i32
    %1 = arith.extui %0 : i1 to i32
    %c0_i32_0 = arith.constant 0 : i32
    %2 = arith.cmpi ne, %1, %c0_i32_0 : i32
    scf.if %2 {
      %c0_8 = arith.constant 0 : index
      %c0_9 = arith.constant 0 : index
      %9 = vector.load %arg5[%c0_8, %c0_9] : memref<1x32xf32, #tpu.memory_space<vmem>>, vector<1x32xf32>
      %10 = vector.shape_cast %9 : vector<1x32xf32> to vector<1x32xf32>
      %11 = vector.broadcast %10 : vector<1x32xf32> to vector<16x32xf32>
      %c0_10 = arith.constant 0 : index
      %c0_11 = arith.constant 0 : index
      %12 = vector.load %arg6[%c0_10, %c0_11] : memref<16x32xf32, #tpu.memory_space<vmem>>, vector<16x32xf32>
      tpu.vector_store %arg6[%c0_10, %c0_11], %11 {strides = array<i32>} : memref<16x32xf32, #tpu.memory_space<vmem>>, vector<16x32xf32>,
    } else {
    }
    %c0 = arith.constant 0 : index
    %c0_1 = arith.constant 0 : index
    %3 = vector.load %arg6[%c0, %c0_1] : memref<16x32xf32, #tpu.memory_space<vmem>>, vector<16x32xf32>
    %c0_2 = arith.constant 0 : index
    %c0_3 = arith.constant 0 : index
    %4 = vector.load %arg3[%c0_2, %c0_3] : memref<16x16xf32, #tpu.memory_space<vmem>>, vector<16x16xf32>
    %c0_4 = arith.constant 0 : index
    %c0_5 = arith.constant 0 : index
    %5 = vector.load %arg4[%c0_4, %c0_5] : memref<16x32xf32, #tpu.memory_space<vmem>>, vector<16x32xf32>
    %cst = arith.constant dense<0.000000e+00> : vector<16x32xf32>
    %6 = tpu.matmul %4, %5, %cst {dimension_numbers = #tpu.dot_dimension_numbers<[1], [0], [0], [1], [0, 0, 1, 1], [], []>} : vector<16x16xf32>, vector<16x32xf32>, vector<16x32xf32> -> vector<16x32xf32>
    %7 = arith.addf %3, %6 : vector<16x32xf32>
    %c0_6 = arith.constant 0 : index
    %c0_7 = arith.constant 0 : index
    %8 = vector.load %arg6[%c0_6, %c0_7] : memref<16x32xf32, #tpu.memory_space<vmem>>, vector<16x32xf32>
    tpu.vector_store %arg6[%c0_6, %c0_7], %7 {strides = array<i32>} : memref<16x32xf32, #tpu.memory_space<vmem>>, vector<16x32xf32>,
    return
  }
  func.func @transform_0(%arg0: i32, %arg1: i32, %arg2: i32) -> (i32, i32) {
    %c0_i32 = arith.constant 0 : i32
    return %arg0, %arg2 : i32, i32
  }
  func.func @transform_1(%arg0: i32, %arg1: i32, %arg2: i32) -> (i32, i32) {
    %c0_i32 = arith.constant 0 : i32
    return %arg2, %arg1 : i32, i32
  }
  func.func @transform_2(%arg0: i32, %arg1: i32, %arg2: i32) -> (i32, i32) {
    %c0_i32 = arith.constant 0 : i32
    %c0_i32_0 = arith.constant 0 : i32
    return %c0_i32, %arg1 : i32, i32
  }
  func.func @transform_3(%arg0: i32, %arg1: i32, %arg2: i32) -> (i32, i32) {
    %c0_i32 = arith.constant 0 : i32
    return %arg0, %arg1 : i32, i32
  }
}

</mosaic_0001>

<llo_original>
// kernel: tpu_custom_call.1
$region0: #{tpu_custom_call.1}
  #allocation0 [shape = 'u32[]', space=smem, size = 0x4, offset = 0x4, fixed_abs, tag = 'smem constant byte address 0x4 - core index']
  #allocation1 [shape = 'u32[144,128]{1,0:T(1,128)}', space=vmem, size = 0x12000, scoped, tag = 'internal scratch']
  %s0 = inlined_call_operand.hbm [shape: f32[16,16], index: 0, kind: input, shape index: {}]
  %s1 = inlined_call_operand.hbm [shape: f32[16,32], index: 1, kind: input, shape index: {}]
  %s2 = inlined_call_operand.vmem [shape: f32[1,32], index: 2, kind: input, shape index: {}]
  %s3 = inlined_call_operand.hbm [shape: f32[16,32], index: 3, kind: output, shape index: {}]
  %s4 = sld [smem:[#allocation0]]
  $region34: #{tpu_custom_call.1} parent=0
    _
  %s6 = ssub.s32 1, %s4
  %s7 = scalar_select 0, %s6, %s4
  $region1: #{tpu_custom_call.1} parent=0
    #allocation2 [shape = 'u8[8192]{0}', space=vmem, size = 0x2000, scoped, tag = 'input window, operand 0, single buffered']
    #allocation3 [shape = 's32[1]{0}', space=sflag, size = 0x4, scoped, tag = 'scoped memory for tpu_custom_call.1']
    #allocation4 [shape = 's32[1]{0}', space=sflag, size = 0x4, scoped, tag = 'scoped memory for tpu_custom_call.1']
    #allocation5 [shape = 'u8[8192]{0}', space=vmem, size = 0x2000, scoped, tag = 'input window, operand 1, single buffered']
    #allocation6 [shape = 's32[1]{0}', space=sflag, size = 0x4, scoped, tag = 'scoped memory for tpu_custom_call.1']
    #allocation7 [shape = 'u8[8192]{0}', space=vmem, size = 0x2000, scoped, tag = 'output window, operand 0, single buffered']
    %8 = vsyncpa [#allocation3], 0
    %9 = vsyncpa [#allocation6], 0
    %10 = vsyncpa [#allocation4], 0
    // Predicated region
    $region2: #{tpu_custom_call.1} parent=1 // pred_check
      _
    $region3: #{tpu_custom_call.1} parent=1 // pred_check_branch
      %12 = sbr.rel (0) target = $region5
    $region4: #{tpu_custom_call.1} parent=1 // pred_region
      %s14 = ssub.s32 256, 256
      %15 = vsyncadd [#allocation3], %s14
      %s16 = sshll.u32 [#allocation2], 4
      %s17 = int_to_ptr.vmem [resolvable:$true] %s16
      %22 = dma.hbm_to_vmem [thread:$0]  %s0, 256, %s17, [#allocation3], 128, 128, 8
    $region5: #{tpu_custom_call.1} parent=1 // pred_fallthru
      _
    // Predicated region
    $region6: #{tpu_custom_call.1} parent=1 // pred_check
      _
    $region7: #{tpu_custom_call.1} parent=1 // pred_check_branch
      %24 = sbr.rel (0) target = $region9
    $region8: #{tpu_custom_call.1} parent=1 // pred_region
      %s26 = ssub.s32 256, 256
      %27 = vsyncadd [#allocation6], %s26
      %s28 = sshll.u32 [#allocation5], 4
      %s29 = int_to_ptr.vmem [resolvable:$true] %s28
      %34 = dma.hbm_to_vmem [thread:$0]  %s1, 256, %s29, [#allocation6], 128, 128, 8
    $region9: #{tpu_custom_call.1} parent=1 // pred_fallthru
      _
    // Predicated region
    $region10: #{tpu_custom_call.1} parent=1 // pred_check
      _
    $region11: #{tpu_custom_call.1} parent=1 // pred_check_branch
      %36 = sbr.rel (0) target = $region13
    $region12: #{tpu_custom_call.1} parent=1 // pred_region
      _
    $region13: #{tpu_custom_call.1} parent=1 // pred_fallthru
      _
    // Predicated region
    $region14: #{tpu_custom_call.1} parent=1 // pred_check
      _
    $region15: #{tpu_custom_call.1} parent=1 // pred_check_branch
      %38 = sbr.rel (0) target = $region17
    $region16: #{tpu_custom_call.1} parent=1 // pred_region
      %39 = dma.done [#allocation3], 256
    $region17: #{tpu_custom_call.1} parent=1 // pred_fallthru
      _
    // Predicated region
    $region18: #{tpu_custom_call.1} parent=1 // pred_check
      _
    $region19: #{tpu_custom_call.1} parent=1 // pred_check_branch
      %41 = sbr.rel (0) target = $region21
    $region20: #{tpu_custom_call.1} parent=1 // pred_region
      %42 = dma.done [#allocation6], 256
    $region21: #{tpu_custom_call.1} parent=1 // pred_fallthru
      _
    %p43 = scmp.eq.s32.totalorder 0, 0
    // Predicated region
    $region22: #{tpu_custom_call.1} parent=1 // pred_check
      %p44 = pneg %p43
    $region23: #{tpu_custom_call.1} parent=1 // pred_check_branch
      %46 = sbr.rel (%p44) target = $region25
    $region24: #{tpu_custom_call.1} parent=1 // pred_region
      %v47 = vld [vmem:[%s2] sm:$0x1]
      %v49 = vlaneseq
      %v50 = vshrl.u32 %v49, 7
      %v51 = vsub.s32 0, %v50
      %v52 = vrot.slane %v47, %v51
      %vm54 = vcmask 261120
      %55 = vst.msk [vmem:[#allocation7] sm:$0xff] %vm54, %v52
      %56 = vst.msk [vmem:[#allocation7 + $0x8] sm:$0xff] %vm54, %v52
    $region25: #{tpu_custom_call.1} parent=1 // pred_fallthru
      _
    %v57 = vld [vmem:[#allocation7] sm:$0xff]
    %v58 = vld [vmem:[#allocation7 + $0x8] sm:$0xff]
    %v59 = vld [vmem:[#allocation2] sm:$0xff]
    %v60 = vld [vmem:[#allocation2 + $0x8] sm:$0xff]
    %v61 = vld [vmem:[#allocation5] sm:$0xff]
    %v62 = vld [vmem:[#allocation5 + $0x8] sm:$0xff]
    %vm63 = vcmask 130048
    %v65 = vsel %vm63, %v59, 0
    %v68 = vsel %vm63, %v60, 0
    %70 = vmatprep.subr.mxu0 0.0
    %71 = vmatpush1.msra.mxu0 %v61
    %72 = vmatprep.subr.mxu0 0.0
    %73 = vmatpush1.msra.mxu0 %v62
    %74 = vmatprep.subr.mxu0 0.0
    %75 = vmatpush1.msra.mxu0 0.0
    %76 = vmatprep.subr.mxu0 0.0
    %77 = vmatpush1.msra.mxu0 0.0
    %78 = vmatprep.subr.mxu0 0.0
    %79 = vmatpush1.msra.mxu0 0.0
    %80 = vmatprep.subr.mxu0 0.0
    %81 = vmatpush1.msra.mxu0 0.0
    %82 = vmatprep.subr.mxu0 0.0
    %83 = vmatpush1.msra.mxu0 0.0
    %84 = vmatprep.subr.mxu0 0.0
    %85 = vmatpush1.msra.mxu0 0.0
    %86 = vmatprep.subr.mxu0 0.0
    %87 = vmatpush1.msra.mxu0 0.0
    %88 = vmatprep.subr.mxu0 0.0
    %89 = vmatpush1.msra.mxu0 0.0
    %90 = vmatprep.subr.mxu0 0.0
    %91 = vmatpush1.msra.mxu0 0.0
    %92 = vmatprep.subr.mxu0 0.0
    %93 = vmatpush1.msra.mxu0 0.0
    %94 = vmatprep.subr.mxu0 0.0
    %95 = vmatpush1.msra.mxu0 0.0
    %96 = vmatprep.subr.mxu0 0.0
    %97 = vmatpush1.msra.mxu0 0.0
    %98 = vmatprep.subr.mxu0 0.0
    %99 = vmatpush1.msra.mxu0 0.0
    %100 = vmatprep.subr.mxu0 0.0
    %101 = vmatpush1.msra.mxu0 0.0
    %102 = vmatprep.subr.mxu0 0.0
    %103 = vmatpush1.msra.mxu0 0.0
    %104 = vmatprep.subr.mxu0 0.0
    %105 = vmatpush1.msra.mxu0 0.0
    %106 = vmatprep.subr.mxu0 0.0
    %107 = vmatpush1.msra.mxu0 0.0
    %108 = vmatprep.subr.mxu0 0.0
    %109 = vmatpush1.msra.mxu0 0.0
    %110 = vmatprep.subr.mxu0 0.0
    %111 = vmatpush1.msra.mxu0 0.0
    %112 = vmatprep.subr.mxu0 0.0
    %113 = vmatpush1.msra.mxu0 0.0
    %114 = vmatprep.subr.mxu0 0.0
    %115 = vmatpush1.msra.mxu0 0.0
    %116 = vmatprep.subr.mxu0 0.0
    %117 = vmatpush1.msra.mxu0 0.0
    %118 = vmatprep.subr.mxu0 0.0
    %119 = vmatpush1.msra.mxu0 0.0
    %120 = vmatprep.subr.mxu0 0.0
    %121 = vmatpush1.msra.mxu0 0.0
    %122 = vmatprep.subr.mxu0 0.0
    %123 = vmatpush1.msra.mxu0 0.0
    %124 = vmatprep.subr.mxu0 0.0
    %125 = vmatpush1.msra.mxu0 0.0
    %126 = vmatprep.subr.mxu0 0.0
    %127 = vmatpush1.msra.mxu0 0.0
    %128 = vmatprep.subr.mxu0 0.0
    %129 = vmatpush1.msra.mxu0 0.0
    %130 = vmatprep.subr.mxu0 0.0
    %131 = vmatpush1.msra.mxu0 0.0
    %132 = vmatprep.subr.mxu0 0.0
    %133 = vmatpush1.msra.mxu0 0.0
    %134 = vmatprep.mubr.f32.mxu0 0.0
    %135 = vmatmul.mubr.f32.gmra.mrb[0].mxu0 %v65
    %v136 = vpop.f32.mrb[0].mxu0
    %v137 = vadd.f32 0.0, %v136
    %v138 = vpop.f32.mrb[0].mxu0
    %139 = vmatprep.mubr.f32.mxu0 0.0
    %140 = vmatmul.mubr.f32.gmra.mrb[0].mxu0 %v68
    %v141 = vpop.f32.mrb[0].mxu0
    %v142 = vadd.f32 0.0, %v141
    %v143 = vpop.f32.mrb[0].mxu0
    %144 = vdwg.mxu0
    %v145 = vadd.f32 %v57, %v137
    %v146 = vadd.f32 %v58, %v142
    %vm147 = vcmask 261120
    %148 = vst.msk [vmem:[#allocation7] sm:$0xff] %vm147, %v145
    %149 = vst.msk [vmem:[#allocation7 + $0x8] sm:$0xff] %vm147, %v146
    // Predicated region
    $region26: #{tpu_custom_call.1} parent=1 // pred_check
      _
    $region27: #{tpu_custom_call.1} parent=1 // pred_check_branch
      %151 = sbr.rel (0) target = $region29
    $region28: #{tpu_custom_call.1} parent=1 // pred_region
      %s153 = ssub.s32 256, 256
      %154 = vsyncadd [#allocation4], %s153
      %s155 = sshll.u32 [#allocation7], 4
      %s156 = int_to_ptr.vmem [resolvable:$true] %s155
      %161 = dma.vmem_to_hbm [thread:$0]  %s156, 256, %s3, [#allocation4], 128, 128, 8
    $region29: #{tpu_custom_call.1} parent=1 // pred_fallthru
      _
    // Predicated region
    $region30: #{tpu_custom_call.1} parent=1 // pred_check
      _
    $region31: #{tpu_custom_call.1} parent=1 // pred_check_branch
      %163 = sbr.rel (0) target = $region33
    $region32: #{tpu_custom_call.1} parent=1 // pred_region
      %164 = dma.done [#allocation4], 256
    $region33: #{tpu_custom_call.1} parent=1 // pred_fallthru
      _
    %165 = vsyncpa [#allocation3], 1
    %166 = vsyncpa [#allocation6], 1
    %167 = vsyncpa [#allocation4], 1

</llo_original>
